<compile_context>
chip_gen: v7x
topology: tpu7x:2x2x1
jax: 0.10.0
libtpu: 0.0.40
codegen_flags: <defaults>
</compile_context>

<pallas_src>
import functools

import jax
import jax.numpy as jnp
from jax.experimental import pallas as pl
from jax.experimental.pallas import tpu as pltpu

LANES = 128


def _chip_config():
    """Generation-aware launch parameters (safe defaults if kind unknown)."""
    kind = ""
    try:
        kind = jax.devices()[0].device_kind.lower()
    except Exception:
        pass
    if "v7" in kind:
        # 2 TensorCores/chip, 64 MiB physical VMEM: 2-way "parallel" split,
        # bigger tiles, explicit scoped-VMEM bump (stay well under 64 MiB).
        return dict(parts=2, max_tile_rows=4096,
                    vmem_limit_bytes=48 * 1024 * 1024)
    # v5e / v6e: single TensorCore -> a partition split is a pure-overhead
    # serial loop; keep 2048-row tiles under the 16/32 MiB scoped default.
    return dict(parts=1, max_tile_rows=2048, vmem_limit_bytes=None)


def _make_bce_kernel(*, tile_rows, tiles_per_part, num_tiles, valid_rows,
                     has_dummy, use_weight):
    """Builds the kernel body. `use_weight` toggles the 3rd input stream."""
    groups = tile_rows // 8
    ragged_last = (num_tiles * tile_rows != valid_rows)

    def _accumulate(o_ref, per):
        # Row-reduce the (tile_rows, 128) tile to a single (8, 128) vreg-tile
        # before the read-modify-write: only one accumulator vld + vst per
        # grid step (vst is the scarcest bundle slot).
        o_ref[...] += per.reshape(groups, 8, LANES).sum(axis=0)

    def _tile_body(x_ref, t_ref, w_ref, o_ref, g):
        x = x_ref[...].astype(jnp.float32)
        t = t_ref[...].astype(jnp.float32)
        # Numerically-stable BCE with logits (same formula PyTorch uses):
        #   loss = max(x, 0) - x * t + log(1 + exp(-|x|))
        per = jnp.maximum(x, 0.0) - x * t + jnp.log1p(jnp.exp(-jnp.abs(x)))
        if use_weight:
            per = per * w_ref[...].astype(jnp.float32)

        if ragged_last:
            # Interior tiles accumulate raw; only the boundary tile pays for
            # the iota/compare/select.
            @pl.when(g < num_tiles - 1)
            def _():
                _accumulate(o_ref, per)

            @pl.when(g == num_tiles - 1)
            def _():
                row = (jax.lax.broadcasted_iota(
                    jnp.int32, (tile_rows, LANES), 0) + g * tile_rows)
                # Keep this a select (not a multiply): the out-of-bounds rows
                # of the partial boundary block hold garbage that may turn
                # into NaN/Inf through exp/log1p; select discards it safely.
                _accumulate(o_ref, jnp.where(row < valid_rows, per, 0.0))
        else:
            _accumulate(o_ref, per)

    def _compute(x_ref, t_ref, w_ref, o_ref):
        p = pl.program_id(0)
        j = pl.program_id(1)
        g = p * tiles_per_part + j

        @pl.when(j == 0)
        def _():
            o_ref[...] = jnp.zeros_like(o_ref)

        if has_dummy:
            # Duplicate clamped tiles of the partition split: DMA is already
            # elided (same block index); skip the compute too.
            @pl.when(g < num_tiles)
            def _():
                _tile_body(x_ref, t_ref, w_ref, o_ref, g)
        else:
            _tile_body(x_ref, t_ref, w_ref, o_ref, g)

    if use_weight:
        def kernel(x_ref, t_ref, w_ref, o_ref):
            _compute(x_ref, t_ref, w_ref, o_ref)
    else:
        def kernel(x_ref, t_ref, o_ref):
            _compute(x_ref, t_ref, None, o_ref)
    return kernel


def _bce_weighted_sum(inputs):
    """Sum of (optionally weighted) BCE-with-logits over lane-dense slabs.

    `inputs` is [x2d, t2d] or [x2d, t2d, w2d]; each (rows, 128), native dtype.
    """
    rows = inputs[0].shape[0]
    cfg = _chip_config()
    tile_rows = min(cfg["max_tile_rows"], -(-rows // 8) * 8)   # multiple of 8
    num_tiles = -(-rows // tile_rows)
    parts = min(cfg["parts"], num_tiles)
    tiles_per_part = -(-num_tiles // parts)
    has_dummy = parts * tiles_per_part != num_tiles
    use_weight = (len(inputs) == 3)

    def in_map(p, j):
        g = p * tiles_per_part + j
        return (jnp.minimum(g, num_tiles - 1), 0)   # clamp; dummies skipped

    kernel = _make_bce_kernel(
        tile_rows=tile_rows, tiles_per_part=tiles_per_part,
        num_tiles=num_tiles, valid_rows=rows,
        has_dummy=has_dummy, use_weight=use_weight)

    tile_spec = pl.BlockSpec((tile_rows, LANES), in_map)

    n_main = rows * LANES
    bytes_in = sum(int(a.size) * a.dtype.itemsize for a in inputs)
    out_bytes = parts * 8 * LANES * 4
    cost = pl.CostEstimate(flops=10 * n_main, transcendentals=2 * n_main,
                           bytes_accessed=bytes_in + out_bytes)

    cp_kwargs = dict(dimension_semantics=("parallel", "arbitrary"))
    if cfg["vmem_limit_bytes"]:
        cp_kwargs["vmem_limit_bytes"] = cfg["vmem_limit_bytes"]

    partials = pl.pallas_call(
        kernel,
        out_shape=jax.ShapeDtypeStruct((parts, 8, LANES), jnp.float32),
        grid_spec=pltpu.PrefetchScalarGridSpec(
            num_scalar_prefetch=0,
            grid=(parts, tiles_per_part),
            in_specs=[tile_spec] * len(inputs),
            out_specs=pl.BlockSpec((None, 8, LANES), lambda p, j: (p, 0, 0)),
        ),
        compiler_params=pltpu.CompilerParams(**cp_kwargs),
        cost_estimate=cost,
    )(*inputs)
    return jnp.sum(partials, dtype=jnp.float32)


@functools.partial(jax.jit, static_argnames=(
    "use_weight_mask", "use_focal_weights", "focus_param", "balance_param"))
def multiclass_bce_loss(outputs, targets, weights, *,
                        use_weight_mask=False,
                        use_focal_weights=False,
                        focus_param=2,
                        balance_param=0.25):
    # Same assertions as the PyTorch module's forward.
    assert outputs.ndim == targets.ndim
    assert outputs.shape[0] == targets.shape[0] == weights.shape[0]
    assert outputs.shape[1] == targets.shape[1] == weights.shape[1]

    n = outputs.size
    full_rows = n // LANES
    n_main = full_rows * LANES
    tail = n - n_main                     # < 128

    streams = [outputs, targets] + ([weights] if use_weight_mask else [])
    flats = [a.reshape(-1) for a in streams]   # native dtype; cast in-kernel

    total = jnp.float32(0.0)
    if full_rows > 0:
        # Lane-dense (rows, 128) slab.  When n % 128 == 0 this reshape is a
        # free relayout; only genuinely ragged n pays a prefix slice (never a
        # full jnp.pad of every input stream).
        if tail:
            slabs = [f[:n_main].reshape(full_rows, LANES) for f in flats]
        else:
            slabs = [f.reshape(full_rows, LANES) for f in flats]
        total = total + _bce_weighted_sum(slabs)
    if tail:
        # <128 leftover elements: tiny plain-jnp epilogue instead of padding.
        x = flats[0][n_main:].astype(jnp.float32)
        t = flats[1][n_main:].astype(jnp.float32)
        per = jnp.maximum(x, 0.0) - x * t + jnp.log1p(jnp.exp(-jnp.abs(x)))
        if use_weight_mask:
            per = per * flats[2][n_main:].astype(jnp.float32)
        total = total + jnp.sum(per, dtype=jnp.float32)

    # PyTorch BCEWithLogitsLoss with `weight` still divides by the element
    # count (not the weight sum) under mean reduction.
    bce_loss = total / jnp.float32(n)

    if use_focal_weights:
        # Matches the PyTorch module: focal scaling applied to the scalar mean.
        logpt = -bce_loss
        pt = jnp.exp(logpt)
        focal_loss = -((1.0 - pt) ** focus_param) * logpt
        return jnp.float32(balance_param) * focal_loss
    return bce_loss


def _reference(outputs, targets, weights, *, use_weight_mask,
               use_focal_weights, focus_param, balance_param):
    x = outputs.astype(jnp.float32)
    t = targets.astype(jnp.float32)
    per = jnp.maximum(x, 0.0) - x * t + jnp.log1p(jnp.exp(-jnp.abs(x)))
    if use_weight_mask:
        per = per * weights.astype(jnp.float32)
    bce = jnp.mean(per)
    if use_focal_weights:
        logpt = -bce
        pt = jnp.exp(logpt)
        return balance_param * (-((1.0 - pt) ** focus_param) * logpt)
    return bce


if __name__ == "__main__":
    key = jax.random.PRNGKey(0)
    ok = True
    # (2,4,16,16): n % 128 == 0 fast path. (2,4,15,15): ragged rows + jnp tail.
    for shape in ((2, 4, 16, 16), (2, 4, 15, 15)):
        k1, k2, k3, key = jax.random.split(key, 4)
        outputs = jax.random.normal(k1, shape, jnp.float32)
        targets = (jax.random.uniform(k2, shape) > 0.5).astype(jnp.float32)
        weights = jax.random.uniform(k3, shape, jnp.float32)
        for uwm in (False, True):
            for ufw in (False, True):
                got = multiclass_bce_loss(
                    outputs, targets, weights,
                    use_weight_mask=uwm, use_focal_weights=ufw,
                    focus_param=2, balance_param=0.25)
                got = jax.block_until_ready(got)
                want = _reference(
                    outputs, targets, weights,
                    use_weight_mask=uwm, use_focal_weights=ufw,
                    focus_param=2, balance_param=0.25)
                if not jnp.allclose(got, want, rtol=1e-5, atol=1e-6):
                    ok = False
                    print("MISMATCH", shape, uwm, ufw, got, want)

    if ok:
        print("KERNEL_OK")
</pallas_src>

<mosaic_0001>
module attributes {stable_mosaic.version = 11 : i64} {
  func.func @kernel(%arg0: i32, %arg1: i32, %arg2: memref<16x128xf32, #tpu.memory_space<vmem>>, %arg3: memref<16x128xf32, #tpu.memory_space<vmem>>, %arg4: memref<1x8x128xf32, #tpu.memory_space<vmem>>) attributes {dimension_semantics = [#tpu.dimension_semantics<parallel>, #tpu.dimension_semantics<arbitrary>], iteration_bounds = array<i64: 1, 1>, scalar_prefetch = 0 : i64, scratch_operands = 0 : i64, tpu.core_type = #tpu.core_type<tc>, window_params = [{transform_indices = @transform_0, window_bounds = array<i64: 16, 128>}, {transform_indices = @transform_1, window_bounds = array<i64: 16, 128>}, {transform_indices = @transform_2, window_bounds = array<i64: 1, 8, 128>}]} {
    %c0_i32 = arith.constant 0 : i32
    %0 = arith.cmpi eq, %arg1, %c0_i32 : i32
    %1 = arith.extui %0 : i1 to i32
    %c0_i32_0 = arith.constant 0 : i32
    %2 = arith.cmpi ne, %1, %c0_i32_0 : i32
    scf.if %2 {
      %cst_12 = arith.constant 0.000000e+00 : f32
      %23 = vector.broadcast %cst_12 : f32 to vector<8x128xf32>
      %c0_13 = arith.constant 0 : index
      %c0_14 = arith.constant 0 : index
      %c0_15 = arith.constant 0 : index
      %24 = vector.load %arg4[%c0_13, %c0_14, %c0_15] : memref<1x8x128xf32, #tpu.memory_space<vmem>>, vector<1x8x128xf32>
      %25 = vector.shape_cast %24 : vector<1x8x128xf32> to vector<8x128xf32>
      %26 = vector.shape_cast %23 : vector<8x128xf32> to vector<1x8x128xf32>
      tpu.vector_store %arg4[%c0_13, %c0_14, %c0_15], %26 {strides = array<i32>} : memref<1x8x128xf32, #tpu.memory_space<vmem>>, vector<1x8x128xf32>,
    } else {
    }
    %c0 = arith.constant 0 : index
    %c0_1 = arith.constant 0 : index
    %3 = vector.load %arg2[%c0, %c0_1] : memref<16x128xf32, #tpu.memory_space<vmem>>, vector<16x128xf32>
    %c0_2 = arith.constant 0 : index
    %c0_3 = arith.constant 0 : index
    %4 = vector.load %arg3[%c0_2, %c0_3] : memref<16x128xf32, #tpu.memory_space<vmem>>, vector<16x128xf32>
    %cst = arith.constant 0.000000e+00 : f32
    %5 = vector.broadcast %cst : f32 to vector<16x128xf32>
    %6 = arith.maximumf %3, %5 : vector<16x128xf32>
    %7 = arith.mulf %3, %4 : vector<16x128xf32>
    %8 = arith.subf %6, %7 : vector<16x128xf32>
    %9 = math.absf %3 : vector<16x128xf32>
    %cst_4 = arith.constant 0.000000e+00 : f32
    %10 = vector.broadcast %cst_4 : f32 to vector<16x128xf32>
    %11 = arith.subf %10, %9 : vector<16x128xf32>
    %12 = math.exp %11 : vector<16x128xf32>
    %13 = math.log1p %12 : vector<16x128xf32>
    %14 = arith.addf %8, %13 : vector<16x128xf32>
    %c0_5 = arith.constant 0 : index
    %c0_6 = arith.constant 0 : index
    %c0_7 = arith.constant 0 : index
    %15 = vector.load %arg4[%c0_5, %c0_6, %c0_7] : memref<1x8x128xf32, #tpu.memory_space<vmem>>, vector<1x8x128xf32>
    %16 = vector.shape_cast %15 : vector<1x8x128xf32> to vector<8x128xf32>
    %17 = vector.shape_cast %14 : vector<16x128xf32> to vector<2x8x128xf32>
    %cst_8 = arith.constant dense<0.000000e+00> : vector<8x128xf32>
    %18 = vector.multi_reduction <add>, %17, %cst_8 [0] : vector<2x8x128xf32> to vector<8x128xf32>
    %19 = arith.addf %16, %18 : vector<8x128xf32>
    %c0_9 = arith.constant 0 : index
    %c0_10 = arith.constant 0 : index
    %c0_11 = arith.constant 0 : index
    %20 = vector.load %arg4[%c0_9, %c0_10, %c0_11] : memref<1x8x128xf32, #tpu.memory_space<vmem>>, vector<1x8x128xf32>
    %21 = vector.shape_cast %20 : vector<1x8x128xf32> to vector<8x128xf32>
    %22 = vector.shape_cast %19 : vector<8x128xf32> to vector<1x8x128xf32>
    tpu.vector_store %arg4[%c0_9, %c0_10, %c0_11], %22 {strides = array<i32>} : memref<1x8x128xf32, #tpu.memory_space<vmem>>, vector<1x8x128xf32>,
    return
  }
  func.func @transform_0(%arg0: i32, %arg1: i32) -> (i32, i32) {
    %c1_i32 = arith.constant 1 : i32
    %0 = arith.muli %arg0, %c1_i32 : i32
    %1 = arith.addi %0, %arg1 : i32
    %c0_i32 = arith.constant 0 : i32
    %2 = arith.minsi %1, %c0_i32 : i32
    %c0_i32_0 = arith.constant 0 : i32
    %c0_i32_1 = arith.constant 0 : i32
    return %2, %c0_i32_0 : i32, i32
  }
  func.func @transform_1(%arg0: i32, %arg1: i32) -> (i32, i32) {
    %c1_i32 = arith.constant 1 : i32
    %0 = arith.muli %arg0, %c1_i32 : i32
    %1 = arith.addi %0, %arg1 : i32
    %c0_i32 = arith.constant 0 : i32
    %2 = arith.minsi %1, %c0_i32 : i32
    %c0_i32_0 = arith.constant 0 : i32
    %c0_i32_1 = arith.constant 0 : i32
    return %2, %c0_i32_0 : i32, i32
  }
  func.func @transform_2(%arg0: i32, %arg1: i32) -> (i32, i32, i32) {
    %c0_i32 = arith.constant 0 : i32
    %c0_i32_0 = arith.constant 0 : i32
    %c0_i32_1 = arith.constant 0 : i32
    return %arg0, %c0_i32, %c0_i32_0 : i32, i32, i32
  }
}

</mosaic_0001>

<llo_original>
// kernel: multiclass_bce_loss.1
$region0: #{multiclass_bce_loss.1}
  #allocation0 [shape = 'u32[]', space=smem, size = 0x4, offset = 0x4, fixed_abs, tag = 'smem constant byte address 0x4 - core index']
  #allocation1 [shape = 'u32[144,128]{1,0:T(1,128)}', space=vmem, size = 0x12000, scoped, tag = 'internal scratch']
  %s0 = inlined_call_operand.vmem [shape: f32[16,128], index: 0, kind: input, shape index: {}]
  %s1 = inlined_call_operand.vmem [shape: f32[16,128], index: 1, kind: input, shape index: {}]
  %s2 = inlined_call_operand.vmem [shape: f32[1,8,128], index: 2, kind: output, shape index: {}]
  %s3 = sld [smem:[#allocation0]]
  $region22: #{multiclass_bce_loss.1} parent=0
    _
  %s5 = ssub.s32 1, %s3
  %s6 = scalar_select 0, %s5, %s3
  // Predicated region
  $region2: #{multiclass_bce_loss.1} parent=0 // pred_check
    _
  $region3: #{multiclass_bce_loss.1} parent=0 // pred_check_branch
    %8 = sbr.rel (0) target = $region5
  $region4: #{multiclass_bce_loss.1} parent=0 // pred_region
    %s9 = sadd.s32 0, 0
    %p10 = scmp.lt.s32.totalorder %s9, 0
    %s11 = scalar_select %p10, %s9, 0
    %s12 = smul.u32 2, %s11
    %p13 = scmp.lt.s32.totalorder %s12, 1
    %s14 = scalar_select %p13, %s12, 1
    %s15 = smul.addr %s14, 8
    %s16 = scalar_lea.vmem %s0, %s15
    %s17 = sadd.s32 0, 0
    %p18 = scmp.lt.s32.totalorder %s17, 0
    %s19 = scalar_select %p18, %s17, 0
    %s20 = smul.u32 2, %s19
  $region5: #{multiclass_bce_loss.1} parent=0 // pred_fallthru
    _
  // Predicated region
  $region6: #{multiclass_bce_loss.1} parent=0 // pred_check
    _
  $region7: #{multiclass_bce_loss.1} parent=0 // pred_check_branch
    %22 = sbr.rel (0) target = $region9
  $region8: #{multiclass_bce_loss.1} parent=0 // pred_region
    %s23 = sadd.s32 0, 0
    %p24 = scmp.lt.s32.totalorder %s23, 0
    %s25 = scalar_select %p24, %s23, 0
    %s26 = smul.u32 2, %s25
    %p27 = scmp.lt.s32.totalorder %s26, 1
    %s28 = scalar_select %p27, %s26, 1
    %s29 = smul.addr %s28, 8
    %s30 = scalar_lea.vmem %s1, %s29
    %s31 = sadd.s32 0, 0
    %p32 = scmp.lt.s32.totalorder %s31, 0
    %s33 = scalar_select %p32, %s31, 0
    %s34 = smul.u32 2, %s33
  $region9: #{multiclass_bce_loss.1} parent=0 // pred_fallthru
    _
  %s35 = sadd.s32 0, 0
  %p36 = scmp.lt.s32.totalorder %s35, 0
  %s37 = scalar_select %p36, %s35, 0
  %s38 = smul.u32 2, %s37
  %p39 = scmp.lt.s32.totalorder %s38, 1
  %s40 = scalar_select %p39, %s38, 1
  %s41 = smul.addr %s40, 8
  %s42 = scalar_lea.vmem %s0, %s41
  %s43 = sadd.s32 0, 0
  %p44 = scmp.lt.s32.totalorder %s43, 0
  %s45 = scalar_select %p44, %s43, 0
  %s46 = smul.u32 2, %s45
  %p47 = scmp.lt.s32.totalorder %s46, 1
  %s48 = scalar_select %p47, %s46, 1
  %s49 = smul.addr %s48, 8
  %s50 = scalar_lea.vmem %s1, %s49
  %s51 = sadd.s32 0, 0
  %p52 = scmp.lt.s32.totalorder %s51, 0
  %s53 = scalar_select %p52, %s51, 0
  %s54 = smul.u32 2, %s53
  %p55 = scmp.lt.s32.totalorder %s54, 1
  %s56 = scalar_select %p55, %s54, 1
  %s57 = smul.addr %s56, 8
  %s58 = scalar_lea.vmem %s0, %s57
  %s59 = sadd.s32 0, 0
  %p60 = scmp.lt.s32.totalorder %s59, 0
  %s61 = scalar_select %p60, %s59, 0
  %s62 = smul.u32 2, %s61
  %s63 = sadd.s32 0, 0
  %p64 = scmp.lt.s32.totalorder %s63, 0
  %s65 = scalar_select %p64, %s63, 0
  %s66 = smul.u32 2, %s65
  %p67 = scmp.lt.s32.totalorder %s66, 1
  %s68 = scalar_select %p67, %s66, 1
  %s69 = smul.addr %s68, 8
  %s70 = scalar_lea.vmem %s1, %s69
  %s71 = sadd.s32 0, 0
  %p72 = scmp.lt.s32.totalorder %s71, 0
  %s73 = scalar_select %p72, %s71, 0
  %s74 = smul.u32 2, %s73
  %p75 = scmp.eq.s32.totalorder 0, 0
  // Predicated region
  $region10: #{multiclass_bce_loss.1} parent=0 // pred_check
    %p76 = pneg %p75
  $region11: #{multiclass_bce_loss.1} parent=0 // pred_check_branch
    %78 = sbr.rel (%p76) target = $region13
  $region12: #{multiclass_bce_loss.1} parent=0 // pred_region
    %79 = vst [vmem:[%s2] sm:$0xff] 0.0
  $region13: #{multiclass_bce_loss.1} parent=0 // pred_fallthru
    _
  %v80 = vld [vmem:[%s58] sm:$0xff]
  %v81 = vld [vmem:[%s58 + $0x8] sm:$0xff]
  %v82 = vld [vmem:[%s70] sm:$0xff]
  %v83 = vld [vmem:[%s70 + $0x8] sm:$0xff]
  %v84 = vmax.f32 %v80, 0.0
  %v85 = vmax.f32 %v81, 0.0
  %v86 = vmul.f32 %v80, %v82
  %v87 = vmul.f32 %v81, %v83
  %v88 = vsub.f32 %v84, %v86
  %v89 = vsub.f32 %v85, %v87
  %v90 = vand.u32 2147483647, %v80
  %v91 = vand.u32 2147483647, %v81
  %v92 = vsub.f32 0.0, %v90
  %v93 = vsub.f32 0.0, %v91
  %v94 = vmul.f32 %v92, 1.442695
  %v95 = vpow.pop %v94
  %v96 = vmul.f32 %v93, 1.442695
  %v97 = vpow.pop %v96
  %v98 = vadd.f32 %v95, 1.0
  %v99 = vlog2.pop %v98
  %v100 = vmul.f32 %v99, 0.6931472
  %v101 = vmul.f32 -0.5, %v95
  %v102 = vadd.f32 %v101, 1.0
  %v103 = vmul.f32 %v102, %v95
  %v104 = vand.u32 2147483647, %v95
  %vm105 = vcmp.lt.f32.partialorder %v104, 0.0004427343
  %v106 = vsel %vm105, %v103, %v100
  %v107 = vadd.f32 %v97, 1.0
  %v108 = vlog2.pop %v107
  %v109 = vmul.f32 %v108, 0.6931472
  %v110 = vmul.f32 -0.5, %v97
  %v111 = vadd.f32 %v110, 1.0
  %v112 = vmul.f32 %v111, %v97
  %v113 = vand.u32 2147483647, %v97
  %vm114 = vcmp.lt.f32.partialorder %v113, 0.0004427343
  %v115 = vsel %vm114, %v112, %v109
  %v116 = vadd.f32 %v88, %v106
  %v117 = vadd.f32 %v89, %v115
  %v118 = vld [vmem:[%s2] sm:$0xff]
  %v119 = vadd.f32 %v116, %v117
  %v120 = vadd.f32 %v118, %v119
  %121 = vst [vmem:[%s2] sm:$0xff] %v120
  // Predicated region
  $region14: #{multiclass_bce_loss.1} parent=0 // pred_check
    _
  $region15: #{multiclass_bce_loss.1} parent=0 // pred_check_branch
    %123 = sbr.rel (0) target = $region17
  $region16: #{multiclass_bce_loss.1} parent=0 // pred_region
    _
  $region17: #{multiclass_bce_loss.1} parent=0 // pred_fallthru
    _
  // Predicated region
  $region18: #{multiclass_bce_loss.1} parent=0 // pred_check
    _
  $region19: #{multiclass_bce_loss.1} parent=0 // pred_check_branch
    %125 = sbr.rel (0) target = $region21
  $region20: #{multiclass_bce_loss.1} parent=0 // pred_region
    _
  $region21: #{multiclass_bce_loss.1} parent=0 // pred_fallthru
    _

</llo_original>
